<compile_context>
chip_gen: v7x
topology: tpu7x:2x2x1
jax: 0.10.0
libtpu: 0.0.40
codegen_flags: <defaults>
</compile_context>

<pallas_src>
import math

import jax
import jax.numpy as jnp
from jax import lax
from jax.experimental import pallas as pl
from jax.experimental.pallas import tpu as pltpu

_LANES = 128
_VMEM_LIMIT = 48 * 1024 * 1024       # headroom under v7x's 64 MiB/TC
_BLOCK_BYTES = 6 * 1024 * 1024       # per-input grid block, f32-equivalent
_TEMP_BYTES = 512 * 1024             # per f32 temporary in the inner loop
_RAGGED_IO_BYTES = 24 * 1024 * 1024  # VMEM IO budget for the 2-D fallback


def _cdiv(a, b):
    return -(-a // b)


def _round_down(a, m):
    return (a // m) * m


def _default_num_cores():
    # v7x has 2 TensorCores per chip; v5e/v6e have 1.
    try:
        kind = jax.devices()[0].device_kind.lower()
    except Exception:
        return 1
    return 2 if ("v7" in kind or "7x" in kind) else 1


# ---------------------------------------------------------------------------
# Main path: N % 128 == 0, layout (B, R, 128), sublane/lane dense.
# ---------------------------------------------------------------------------
def _make_row_kernel(*, tr, cr, n_sub, r_valid, steps_per_core,
                     has_core_axis, exact):
    def kernel(pred_ref, target_ref, inter_ref, pw_ref, tw_ref):
        if has_core_axis:
            j = pl.program_id(1)
            blk = pl.program_id(0) * steps_per_core + j
        else:
            j = pl.program_id(0)
            blk = j

        @pl.when(j == 0)
        def _init():
            inter_ref[...] = jnp.zeros_like(inter_ref)
            pw_ref[...] = jnp.zeros_like(pw_ref)
            tw_ref[...] = jnp.zeros_like(tw_ref)

        row_base = blk * tr

        def accumulate(masked):
            def body(s, carry):
                r0 = pl.multiple_of(s * cr, cr)
                p = pred_ref[:, pl.ds(r0, cr), :].astype(jnp.float32)
                t = target_ref[:, pl.ds(r0, cr), :].astype(jnp.float32)
                if masked:
                    rows = (row_base + r0
                            + lax.broadcasted_iota(jnp.int32, p.shape, 1))
                    valid = rows < r_valid
                    p = jnp.where(valid, p, 0.0)
                    t = jnp.where(valid, t, 0.0)
                w = t + 0.1
                pw = p * w
                tw = t * w
                inter_ref[...] += jnp.sum(pw * t, axis=1)[None]
                pw_ref[...] += jnp.sum(pw, axis=1)[None]
                tw_ref[...] += jnp.sum(tw, axis=1)[None]
                return carry

            lax.fori_loop(0, n_sub, body, 0)

        if exact:
            accumulate(False)
        else:
            tail = row_base + tr > r_valid

            @pl.when(jnp.logical_not(tail))
            def _full():
                accumulate(False)

            @pl.when(tail)
            def _tail():
                accumulate(True)

    return kernel


def _row_partials(pred2, target2, block_bytes, num_cores):
    B, N = pred2.shape
    R = N // _LANES

    min_itemsize = min(jnp.dtype(pred2.dtype).itemsize,
                       jnp.dtype(target2.dtype).itemsize)
    row_mult = 8 * max(1, 4 // min_itemsize)   # f32:8, bf16:16, int8/fp8:32

    # Rows per grid block (sized on the f32-equivalent footprint) and rows
    # per inner compute sub-chunk (bounds in-kernel f32 temporaries).
    tr = max(row_mult, _round_down(block_bytes // (B * _LANES * 4), row_mult))
    cr = max(row_mult, _round_down(_TEMP_BYTES // (B * _LANES * 4), row_mult))

    if tr >= R:
        tr = R                       # one block spanning the full row axis
    if cr >= tr:
        cr = tr
    else:
        tr = _round_down(tr, cr)     # keep tr an exact multiple of cr
    n_sub = tr // cr

    r_blocks = _cdiv(R, tr)
    if num_cores is None:
        num_cores = _default_num_cores()
    num_cores = max(1, min(num_cores, r_blocks))
    has_core_axis = num_cores > 1

    pred3 = pred2.reshape(B, R, _LANES)      # free reshapes (contiguous)
    target3 = target2.reshape(B, R, _LANES)

    if has_core_axis:
        spc = _cdiv(r_blocks, num_cores)
        grid = (num_cores, spc)
        total_blocks = num_cores * spc
        last = r_blocks - 1
        in_map = lambda c, j: (0, jnp.minimum(c * spc + j, last), 0)
        out_map = lambda c, j: (c, 0, 0)
        semantics = (pltpu.CORE_PARALLEL, pltpu.ARBITRARY)
    else:
        spc = r_blocks
        grid = (r_blocks,)
        total_blocks = r_blocks
        in_map = lambda j: (0, j, 0)
        out_map = lambda j: (0, 0, 0)
        semantics = ("arbitrary",)

    exact = total_blocks * tr == R

    kernel = _make_row_kernel(tr=tr, cr=cr, n_sub=n_sub, r_valid=R,
                              steps_per_core=spc, has_core_axis=has_core_axis,
                              exact=exact)

    in_spec = pl.BlockSpec((B, tr, _LANES), in_map)
    out_spec = pl.BlockSpec((1, B, _LANES), out_map)
    out_sds = jax.ShapeDtypeStruct((num_cores, B, _LANES), jnp.float32)

    inter_p, pw_p, tw_p = pl.pallas_call(
        kernel,
        out_shape=(out_sds, out_sds, out_sds),
        grid_spec=pltpu.PrefetchScalarGridSpec(
            num_scalar_prefetch=0,
            grid=grid,
            in_specs=[in_spec, in_spec],
            out_specs=[out_spec, out_spec, out_spec],
        ),
        compiler_params=pltpu.CompilerParams(
            dimension_semantics=semantics,
            vmem_limit_bytes=_VMEM_LIMIT,
        ),
    )(pred3, target3)

    return (jnp.sum(inter_p, axis=(0, 2)),
            jnp.sum(pw_p, axis=(0, 2)),
            jnp.sum(tw_p, axis=(0, 2)))


# ---------------------------------------------------------------------------
# Ragged fallback: N % 128 != 0.  Zero-copy (B, N) tiling with in-kernel
# lane masking.  Sublane-sparse for small B, but avoids any HBM copy.
# ---------------------------------------------------------------------------
def _make_flat_kernel(*, tn, cl, n_sub, n_valid, exact):
    def kernel(pred_ref, target_ref, inter_ref, pw_ref, tw_ref):
        j = pl.program_id(0)

        @pl.when(j == 0)
        def _init():
            inter_ref[...] = jnp.zeros_like(inter_ref)
            pw_ref[...] = jnp.zeros_like(pw_ref)
            tw_ref[...] = jnp.zeros_like(tw_ref)

        col_base = j * tn

        def accumulate(masked):
            def body(s, carry):
                c0 = pl.multiple_of(s * cl, cl)
                p = pred_ref[:, pl.ds(c0, cl)].astype(jnp.float32)
                t = target_ref[:, pl.ds(c0, cl)].astype(jnp.float32)
                if masked:
                    cols = (col_base + c0
                            + lax.broadcasted_iota(jnp.int32, p.shape, 1))
                    valid = cols < n_valid
                    p = jnp.where(valid, p, 0.0)
                    t = jnp.where(valid, t, 0.0)
                w = t + 0.1
                pw = p * w
                tw = t * w
                inter_ref[...] += jnp.sum(pw * t, axis=1)[None]
                pw_ref[...] += jnp.sum(pw, axis=1)[None]
                tw_ref[...] += jnp.sum(tw, axis=1)[None]
                return carry

            lax.fori_loop(0, n_sub, body, 0)

        if exact:
            accumulate(False)
        else:
            tail = col_base + tn > n_valid

            @pl.when(jnp.logical_not(tail))
            def _full():
                accumulate(False)

            @pl.when(tail)
            def _tail():
                accumulate(True)

    return kernel


def _flat_partials(pred2, target2):
    B, N = pred2.shape
    B8 = _cdiv(B, 8) * 8
    itemsize = max(jnp.dtype(pred2.dtype).itemsize,
                   jnp.dtype(target2.dtype).itemsize)

    if N < _LANES:
        tn = N                       # single unblocked lane block
    else:
        tn = _round_down(_RAGGED_IO_BYTES // (4 * B8 * itemsize), _LANES)
        tn = max(_LANES, min(tn, _round_down(N, _LANES)))

    cl = max(_LANES, _round_down(_TEMP_BYTES // (B8 * 4), _LANES))
    if cl >= tn:
        cl = tn
    else:
        tn = _round_down(tn, cl)
    n_sub = tn // cl

    steps = _cdiv(N, tn)
    exact = steps * tn == N

    kernel = _make_flat_kernel(tn=tn, cl=cl, n_sub=n_sub, n_valid=N,
                               exact=exact)

    in_spec = pl.BlockSpec((B, tn), lambda j: (0, j))
    out_spec = pl.BlockSpec((1, B), lambda j: (0, 0))
    out_sds = jax.ShapeDtypeStruct((1, B), jnp.float32)

    inter_p, pw_p, tw_p = pl.pallas_call(
        kernel,
        out_shape=(out_sds, out_sds, out_sds),
        grid_spec=pltpu.PrefetchScalarGridSpec(
            num_scalar_prefetch=0,
            grid=(steps,),
            in_specs=[in_spec, in_spec],
            out_specs=[out_spec, out_spec, out_spec],
        ),
        compiler_params=pltpu.CompilerParams(
            dimension_semantics=("arbitrary",),
            vmem_limit_bytes=_VMEM_LIMIT,
        ),
    )(pred2, target2)

    return inter_p[0], pw_p[0], tw_p[0]


# ---------------------------------------------------------------------------
# Public wrapper (DiceLoss.forward equivalent).
# ---------------------------------------------------------------------------
def dice_loss(pred, target, smooth=1.0, *, block_bytes=_BLOCK_BYTES,
              num_cores=None):
    """Pallas implementation of DiceLoss.forward; returns a scalar."""
    assert pred.shape == target.shape, (pred.shape, target.shape)
    B = pred.shape[0]
    N = math.prod(pred.shape[1:])

    pred2 = pred.reshape(B, N)       # free (contiguous) reshape, native dtype
    target2 = target.reshape(B, N)

    if N % _LANES == 0:
        intersection, pred_w, target_w = _row_partials(
            pred2, target2, block_bytes, num_cores)
    else:
        intersection, pred_w, target_w = _flat_partials(pred2, target2)

    smooth = jnp.float32(smooth)
    dice = (2.0 * intersection + smooth) / (pred_w + target_w + smooth)
    return jnp.sum(1.0 - dice)


def _dice_loss_ref(pred, target, smooth=1.0):
    pred = pred.astype(jnp.float32)
    target = target.astype(jnp.float32)
    axes = tuple(range(1, pred.ndim))
    weight = target + 0.1
    intersection = jnp.sum(pred * target * weight, axis=axes)
    union = jnp.sum(pred * weight, axis=axes) + jnp.sum(target * weight, axis=axes)
    dice = (2.0 * intersection + smooth) / (union + smooth)
    return jnp.sum(1.0 - dice)


if __name__ == "__main__":
    key = jax.random.PRNGKey(0)
    k1, k2, k3, k4, k5, k6 = jax.random.split(key, 6)

    # Case 1: B=2, C=4, H=W=16 (N % 128 == 0 -> lane/sublane-dense row path).
    B, C, H, W = 2, 4, 16, 16
    pred = jax.nn.sigmoid(jax.random.normal(k1, (B, C, H, W), dtype=jnp.float32))
    target = (jax.random.uniform(k2, (B, C, H, W)) > 0.5).astype(jnp.float32)
    loss = dice_loss(pred, target, smooth=1.0)
    jax.block_until_ready(loss)
    ref = _dice_loss_ref(pred, target, smooth=1.0)
    assert jnp.allclose(loss, ref, rtol=1e-5, atol=1e-5), (loss, ref)

    # Case 2: multi-block row path with an in-kernel-masked ragged row tail
    # (R=15 rows, forced 8-row blocks).
    B2, C2, H2, W2 = 2, 3, 16, 40            # N = 1920 -> R = 15
    pred2 = jax.nn.sigmoid(jax.random.normal(k3, (B2, C2, H2, W2), dtype=jnp.float32))
    target2 = (jax.random.uniform(k4, (B2, C2, H2, W2)) > 0.5).astype(jnp.float32)
    loss2 = dice_loss(pred2, target2, smooth=1.0, block_bytes=8 * 1024)
    jax.block_until_ready(loss2)
    ref2 = _dice_loss_ref(pred2, target2, smooth=1.0)
    assert jnp.allclose(loss2, ref2, rtol=1e-5, atol=1e-5), (loss2, ref2)

    # Case 3: N % 128 != 0 -> zero-copy 2-D fallback with lane masking.
    B3, C3, H3, W3 = 2, 3, 17, 19            # N = 969
    pred3 = jax.nn.sigmoid(jax.random.normal(k5, (B3, C3, H3, W3), dtype=jnp.float32))
    target3 = (jax.random.uniform(k6, (B3, C3, H3, W3)) > 0.5).astype(jnp.float32)
    loss3 = dice_loss(pred3, target3, smooth=1.0)
    jax.block_until_ready(loss3)
    ref3 = _dice_loss_ref(pred3, target3, smooth=1.0)
    assert jnp.allclose(loss3, ref3, rtol=1e-5, atol=1e-5), (loss3, ref3)

    print("KERNEL_OK")
</pallas_src>

<mosaic_0001>
module attributes {stable_mosaic.version = 11 : i64} {
  func.func @kernel(%arg0: i32, %arg1: memref<2x8x128xf32, #tpu.memory_space<vmem>>, %arg2: memref<2x8x128xf32, #tpu.memory_space<vmem>>, %arg3: memref<1x2x128xf32, #tpu.memory_space<vmem>>, %arg4: memref<1x2x128xf32, #tpu.memory_space<vmem>>, %arg5: memref<1x2x128xf32, #tpu.memory_space<vmem>>) attributes {dimension_semantics = [#tpu.dimension_semantics<arbitrary>], iteration_bounds = array<i64: 1>, scalar_prefetch = 0 : i64, scratch_operands = 0 : i64, tpu.core_type = #tpu.core_type<tc>, window_params = [{transform_indices = @transform_0, window_bounds = array<i64: 2, 8, 128>}, {transform_indices = @transform_1, window_bounds = array<i64: 2, 8, 128>}, {pipeline_mode = #tpu.pipeline_mode<synchronous>, transform_indices = @transform_2, window_bounds = array<i64: 1, 2, 128>}, {pipeline_mode = #tpu.pipeline_mode<synchronous>, transform_indices = @transform_3, window_bounds = array<i64: 1, 2, 128>}, {pipeline_mode = #tpu.pipeline_mode<synchronous>, transform_indices = @transform_4, window_bounds = array<i64: 1, 2, 128>}]} {
    %c0_i32 = arith.constant 0 : i32
    %0 = arith.cmpi eq, %arg0, %c0_i32 : i32
    %1 = arith.extui %0 : i1 to i32
    %c0_i32_0 = arith.constant 0 : i32
    %2 = arith.cmpi ne, %1, %c0_i32_0 : i32
    scf.if %2 {
      %cst_26 = arith.constant 0.000000e+00 : f32
      %29 = vector.broadcast %cst_26 : f32 to vector<1x2x128xf32>
      %c0_27 = arith.constant 0 : index
      %c0_28 = arith.constant 0 : index
      %c0_29 = arith.constant 0 : index
      %30 = vector.load %arg3[%c0_27, %c0_28, %c0_29] : memref<1x2x128xf32, #tpu.memory_space<vmem>>, vector<1x2x128xf32>
      tpu.vector_store %arg3[%c0_27, %c0_28, %c0_29], %29 {strides = array<i32>} : memref<1x2x128xf32, #tpu.memory_space<vmem>>, vector<1x2x128xf32>,
      %cst_30 = arith.constant 0.000000e+00 : f32
      %31 = vector.broadcast %cst_30 : f32 to vector<1x2x128xf32>
      %c0_31 = arith.constant 0 : index
      %c0_32 = arith.constant 0 : index
      %c0_33 = arith.constant 0 : index
      %32 = vector.load %arg4[%c0_31, %c0_32, %c0_33] : memref<1x2x128xf32, #tpu.memory_space<vmem>>, vector<1x2x128xf32>
      tpu.vector_store %arg4[%c0_31, %c0_32, %c0_33], %31 {strides = array<i32>} : memref<1x2x128xf32, #tpu.memory_space<vmem>>, vector<1x2x128xf32>,
      %cst_34 = arith.constant 0.000000e+00 : f32
      %33 = vector.broadcast %cst_34 : f32 to vector<1x2x128xf32>
      %c0_35 = arith.constant 0 : index
      %c0_36 = arith.constant 0 : index
      %c0_37 = arith.constant 0 : index
      %34 = vector.load %arg5[%c0_35, %c0_36, %c0_37] : memref<1x2x128xf32, #tpu.memory_space<vmem>>, vector<1x2x128xf32>
      tpu.vector_store %arg5[%c0_35, %c0_36, %c0_37], %33 {strides = array<i32>} : memref<1x2x128xf32, #tpu.memory_space<vmem>>, vector<1x2x128xf32>,
    } else {
    }
    %c0_i32_1 = arith.constant 0 : i32
    %c8_i32 = arith.constant 8 : i32
    %3 = arith.muli %c0_i32_1, %c8_i32 : i32
    %4 = tpu.assume_multiple %3, 8 : i32
    %c0 = arith.constant 0 : index
    %5 = arith.index_cast %4 : i32 to index
    %c0_2 = arith.constant 0 : index
    %6 = vector.load %arg1[%c0, %5, %c0_2] : memref<2x8x128xf32, #tpu.memory_space<vmem>>, vector<2x8x128xf32>
    %c0_3 = arith.constant 0 : index
    %7 = arith.index_cast %4 : i32 to index
    %c0_4 = arith.constant 0 : index
    %8 = vector.load %arg2[%c0_3, %7, %c0_4] : memref<2x8x128xf32, #tpu.memory_space<vmem>>, vector<2x8x128xf32>
    %cst = arith.constant 1.000000e-01 : f32
    %9 = vector.broadcast %cst : f32 to vector<2x8x128xf32>
    %10 = arith.addf %8, %9 : vector<2x8x128xf32>
    %11 = arith.mulf %6, %10 : vector<2x8x128xf32>
    %12 = arith.mulf %8, %10 : vector<2x8x128xf32>
    %c0_5 = arith.constant 0 : index
    %c0_6 = arith.constant 0 : index
    %c0_7 = arith.constant 0 : index
    %13 = vector.load %arg3[%c0_5, %c0_6, %c0_7] : memref<1x2x128xf32, #tpu.memory_space<vmem>>, vector<1x2x128xf32>
    %14 = arith.mulf %11, %8 : vector<2x8x128xf32>
    %cst_8 = arith.constant dense<0.000000e+00> : vector<2x128xf32>
    %15 = vector.multi_reduction <add>, %14, %cst_8 [1] : vector<2x8x128xf32> to vector<2x128xf32>
    %16 = vector.shape_cast %15 : vector<2x128xf32> to vector<1x2x128xf32>
    %17 = arith.addf %13, %16 : vector<1x2x128xf32>
    %c0_9 = arith.constant 0 : index
    %c0_10 = arith.constant 0 : index
    %c0_11 = arith.constant 0 : index
    %18 = vector.load %arg3[%c0_9, %c0_10, %c0_11] : memref<1x2x128xf32, #tpu.memory_space<vmem>>, vector<1x2x128xf32>
    tpu.vector_store %arg3[%c0_9, %c0_10, %c0_11], %17 {strides = array<i32>} : memref<1x2x128xf32, #tpu.memory_space<vmem>>, vector<1x2x128xf32>,
    %c0_12 = arith.constant 0 : index
    %c0_13 = arith.constant 0 : index
    %c0_14 = arith.constant 0 : index
    %19 = vector.load %arg4[%c0_12, %c0_13, %c0_14] : memref<1x2x128xf32, #tpu.memory_space<vmem>>, vector<1x2x128xf32>
    %cst_15 = arith.constant dense<0.000000e+00> : vector<2x128xf32>
    %20 = vector.multi_reduction <add>, %11, %cst_15 [1] : vector<2x8x128xf32> to vector<2x128xf32>
    %21 = vector.shape_cast %20 : vector<2x128xf32> to vector<1x2x128xf32>
    %22 = arith.addf %19, %21 : vector<1x2x128xf32>
    %c0_16 = arith.constant 0 : index
    %c0_17 = arith.constant 0 : index
    %c0_18 = arith.constant 0 : index
    %23 = vector.load %arg4[%c0_16, %c0_17, %c0_18] : memref<1x2x128xf32, #tpu.memory_space<vmem>>, vector<1x2x128xf32>
    tpu.vector_store %arg4[%c0_16, %c0_17, %c0_18], %22 {strides = array<i32>} : memref<1x2x128xf32, #tpu.memory_space<vmem>>, vector<1x2x128xf32>,
    %c0_19 = arith.constant 0 : index
    %c0_20 = arith.constant 0 : index
    %c0_21 = arith.constant 0 : index
    %24 = vector.load %arg5[%c0_19, %c0_20, %c0_21] : memref<1x2x128xf32, #tpu.memory_space<vmem>>, vector<1x2x128xf32>
    %cst_22 = arith.constant dense<0.000000e+00> : vector<2x128xf32>
    %25 = vector.multi_reduction <add>, %12, %cst_22 [1] : vector<2x8x128xf32> to vector<2x128xf32>
    %26 = vector.shape_cast %25 : vector<2x128xf32> to vector<1x2x128xf32>
    %27 = arith.addf %24, %26 : vector<1x2x128xf32>
    %c0_23 = arith.constant 0 : index
    %c0_24 = arith.constant 0 : index
    %c0_25 = arith.constant 0 : index
    %28 = vector.load %arg5[%c0_23, %c0_24, %c0_25] : memref<1x2x128xf32, #tpu.memory_space<vmem>>, vector<1x2x128xf32>
    tpu.vector_store %arg5[%c0_23, %c0_24, %c0_25], %27 {strides = array<i32>} : memref<1x2x128xf32, #tpu.memory_space<vmem>>, vector<1x2x128xf32>,
    %c1_i32 = arith.constant 1 : i32
    return
  }
  func.func @transform_0(%arg0: i32) -> (i32, i32, i32) {
    %c0_i32 = arith.constant 0 : i32
    %c0_i32_0 = arith.constant 0 : i32
    %c0_i32_1 = arith.constant 0 : i32
    return %c0_i32, %arg0, %c0_i32_0 : i32, i32, i32
  }
  func.func @transform_1(%arg0: i32) -> (i32, i32, i32) {
    %c0_i32 = arith.constant 0 : i32
    %c0_i32_0 = arith.constant 0 : i32
    %c0_i32_1 = arith.constant 0 : i32
    return %c0_i32, %arg0, %c0_i32_0 : i32, i32, i32
  }
  func.func @transform_2(%arg0: i32) -> (i32, i32, i32) {
    %c0_i32 = arith.constant 0 : i32
    %c0_i32_0 = arith.constant 0 : i32
    %c0_i32_1 = arith.constant 0 : i32
    %c0_i32_2 = arith.constant 0 : i32
    return %c0_i32, %c0_i32_0, %c0_i32_1 : i32, i32, i32
  }
  func.func @transform_3(%arg0: i32) -> (i32, i32, i32) {
    %c0_i32 = arith.constant 0 : i32
    %c0_i32_0 = arith.constant 0 : i32
    %c0_i32_1 = arith.constant 0 : i32
    %c0_i32_2 = arith.constant 0 : i32
    return %c0_i32, %c0_i32_0, %c0_i32_1 : i32, i32, i32
  }
  func.func @transform_4(%arg0: i32) -> (i32, i32, i32) {
    %c0_i32 = arith.constant 0 : i32
    %c0_i32_0 = arith.constant 0 : i32
    %c0_i32_1 = arith.constant 0 : i32
    %c0_i32_2 = arith.constant 0 : i32
    return %c0_i32, %c0_i32_0, %c0_i32_1 : i32, i32, i32
  }
}

</mosaic_0001>

<llo_original>
// kernel: tpu_custom_call.1
$region0: #{tpu_custom_call.1}
  #allocation0 [shape = 'u32[]', space=smem, size = 0x4, offset = 0x4, fixed_abs, tag = 'smem constant byte address 0x4 - core index']
  #allocation1 [shape = 'u32[144,128]{1,0:T(1,128)}', space=vmem, size = 0x12000, scoped, tag = 'internal scratch']
  %s0 = inlined_call_operand.hbm [shape: f32[2,8,128], index: 0, kind: input, shape index: {}]
  %s1 = inlined_call_operand.hbm [shape: f32[2,8,128], index: 1, kind: input, shape index: {}]
  %s2 = inlined_call_operand.hbm [shape: f32[1,2,128], index: 2, kind: output, shape index: {0}]
  %s3 = inlined_call_operand.hbm [shape: f32[1,2,128], index: 3, kind: output, shape index: {1}]
  %s4 = inlined_call_operand.hbm [shape: f32[1,2,128], index: 4, kind: output, shape index: {2}]
  %5 = xla_tuple %s2, %s3, %s4
  %s6 = sld [smem:[#allocation0]]
  $region46: #{tpu_custom_call.1} parent=0
    _
  %s8 = ssub.s32 1, %s6
  %s9 = scalar_select 0, %s8, %s6
  $region1: #{tpu_custom_call.1} parent=0
    #allocation2 [shape = 'u8[8192]{0}', space=vmem, size = 0x2000, scoped, tag = 'input window, operand 0, single buffered']
    #allocation3 [shape = 's32[1]{0}', space=sflag, size = 0x4, scoped, tag = 'scoped memory for tpu_custom_call.1']
    #allocation4 [shape = 's32[1]{0}', space=sflag, size = 0x4, scoped, tag = 'scoped memory for tpu_custom_call.1']
    #allocation5 [shape = 'u8[8192]{0}', space=vmem, size = 0x2000, scoped, tag = 'input window, operand 1, single buffered']
    #allocation6 [shape = 's32[1]{0}', space=sflag, size = 0x4, scoped, tag = 'scoped memory for tpu_custom_call.1']
    #allocation7 [shape = 'u8[1024]{0}', space=vmem, size = 0x400, scoped, tag = 'output window, operand 0, single buffered']
    #allocation8 [shape = 'u8[1024]{0}', space=vmem, size = 0x400, scoped, tag = 'output window, operand 1, single buffered']
    #allocation9 [shape = 's32[1]{0}', space=sflag, size = 0x4, scoped, tag = 'scoped memory for tpu_custom_call.1']
    #allocation10 [shape = 'u8[1024]{0}', space=vmem, size = 0x400, scoped, tag = 'output window, operand 2, single buffered']
    %10 = vsyncpa [#allocation3], 0
    %11 = vsyncpa [#allocation6], 0
    %12 = vsyncpa [#allocation4], 0
    %13 = vsyncpa [#allocation9], 0
    // Predicated region
    $region2: #{tpu_custom_call.1} parent=1 // pred_check
      _
    $region3: #{tpu_custom_call.1} parent=1 // pred_check_branch
      %15 = sbr.rel (0) target = $region5
    $region4: #{tpu_custom_call.1} parent=1 // pred_region
      %s17 = ssub.s32 256, 256
      %18 = vsyncadd [#allocation3], %s17
      %s19 = sshll.u32 [#allocation2], 4
      %s20 = int_to_ptr.vmem [resolvable:$true] %s19
      %25 = dma.hbm_to_vmem [thread:$0]  %s0, 256, %s20, [#allocation3], 128, 128, 8
    $region5: #{tpu_custom_call.1} parent=1 // pred_fallthru
      _
    // Predicated region
    $region6: #{tpu_custom_call.1} parent=1 // pred_check
      _
    $region7: #{tpu_custom_call.1} parent=1 // pred_check_branch
      %27 = sbr.rel (0) target = $region9
    $region8: #{tpu_custom_call.1} parent=1 // pred_region
      %s29 = ssub.s32 256, 256
      %30 = vsyncadd [#allocation6], %s29
      %s31 = sshll.u32 [#allocation5], 4
      %s32 = int_to_ptr.vmem [resolvable:$true] %s31
      %37 = dma.hbm_to_vmem [thread:$0]  %s1, 256, %s32, [#allocation6], 128, 128, 8
    $region9: #{tpu_custom_call.1} parent=1 // pred_fallthru
      _
    // Predicated region
    $region10: #{tpu_custom_call.1} parent=1 // pred_check
      _
    $region11: #{tpu_custom_call.1} parent=1 // pred_check_branch
      %39 = sbr.rel (0) target = $region13
    $region12: #{tpu_custom_call.1} parent=1 // pred_region
      %40 = dma.done [#allocation3], 256
    $region13: #{tpu_custom_call.1} parent=1 // pred_fallthru
      _
    // Predicated region
    $region14: #{tpu_custom_call.1} parent=1 // pred_check
      _
    $region15: #{tpu_custom_call.1} parent=1 // pred_check_branch
      %42 = sbr.rel (0) target = $region17
    $region16: #{tpu_custom_call.1} parent=1 // pred_region
      %43 = dma.done [#allocation6], 256
    $region17: #{tpu_custom_call.1} parent=1 // pred_fallthru
      _
    %p44 = scmp.eq.s32.totalorder 0, 0
    // Predicated region
    $region18: #{tpu_custom_call.1} parent=1 // pred_check
      %p45 = pneg %p44
    $region19: #{tpu_custom_call.1} parent=1 // pred_check_branch
      %47 = sbr.rel (%p45) target = $region21
    $region20: #{tpu_custom_call.1} parent=1 // pred_region
      %48 = vst [vmem:[#allocation7] sm:$0x3] 0.0
      %49 = vst [vmem:[#allocation8] sm:$0x3] 0.0
      %50 = vst [vmem:[#allocation10] sm:$0x3] 0.0
    $region21: #{tpu_custom_call.1} parent=1 // pred_fallthru
      _
    %v51 = vld [vmem:[#allocation2] sm:$0xff]
    %v52 = vld [vmem:[#allocation2 + $0x8] sm:$0xff]
    %v53 = vld [vmem:[#allocation5] sm:$0xff]
    %v54 = vld [vmem:[#allocation5 + $0x8] sm:$0xff]
    %v55 = vadd.f32 %v53, 0.1
    %v56 = vadd.f32 %v54, 0.1
    %v57 = vmul.f32 %v51, %v55
    %v58 = vmul.f32 %v52, %v56
    %v59 = vmul.f32 %v53, %v55
    %v60 = vmul.f32 %v54, %v56
    %v61 = vld [vmem:[#allocation7] sm:$0x3]
    %v62 = vmul.f32 %v57, %v53
    %v63 = vmul.f32 %v58, %v54
    %v64 = vrot.slane %v62, 4
    %v65 = vadd.f32 %v62, %v64
    %v66 = vrot.slane %v65, 2
    %v67 = vadd.f32 %v65, %v66
    %v68 = vrot.slane %v67, 1
    %v69 = vadd.f32 %v67, %v68
    %v70 = vrot.slane %v63, 4
    %v71 = vadd.f32 %v63, %v70
    %v72 = vrot.slane %v71, 2
    %v73 = vadd.f32 %v71, %v72
    %v74 = vrot.slane %v73, 1
    %v75 = vadd.f32 %v73, %v74
    %vm78 = vcmask 1041409
    %v79 = vsel %vm78, %v75, %v69
    %v81 = vadd.f32 %v61, %v79
    %82 = vst [vmem:[#allocation7] sm:$0x3] %v81
    %v83 = vld [vmem:[#allocation8] sm:$0x3]
    %v84 = vrot.slane %v57, 4
    %v85 = vadd.f32 %v57, %v84
    %v86 = vrot.slane %v85, 2
    %v87 = vadd.f32 %v85, %v86
    %v88 = vrot.slane %v87, 1
    %v89 = vadd.f32 %v87, %v88
    %v90 = vrot.slane %v58, 4
    %v91 = vadd.f32 %v58, %v90
    %v92 = vrot.slane %v91, 2
    %v93 = vadd.f32 %v91, %v92
    %v94 = vrot.slane %v93, 1
    %v95 = vadd.f32 %v93, %v94
    %v98 = vsel %vm78, %v95, %v89
    %v100 = vadd.f32 %v83, %v98
    %101 = vst [vmem:[#allocation8] sm:$0x3] %v100
    %v102 = vld [vmem:[#allocation10] sm:$0x3]
    %v103 = vrot.slane %v59, 4
    %v104 = vadd.f32 %v59, %v103
    %v105 = vrot.slane %v104, 2
    %v106 = vadd.f32 %v104, %v105
    %v107 = vrot.slane %v106, 1
    %v108 = vadd.f32 %v106, %v107
    %v109 = vrot.slane %v60, 4
    %v110 = vadd.f32 %v60, %v109
    %v111 = vrot.slane %v110, 2
    %v112 = vadd.f32 %v110, %v111
    %v113 = vrot.slane %v112, 1
    %v114 = vadd.f32 %v112, %v113
    %v117 = vsel %vm78, %v114, %v108
    %v119 = vadd.f32 %v102, %v117
    %120 = vst [vmem:[#allocation10] sm:$0x3] %v119
    // Predicated region
    $region22: #{tpu_custom_call.1} parent=1 // pred_check
      _
    $region23: #{tpu_custom_call.1} parent=1 // pred_check_branch
      %122 = sbr.rel (0) target = $region25
    $region24: #{tpu_custom_call.1} parent=1 // pred_region
      %s124 = ssub.s32 32, 32
      %125 = vsyncadd [#allocation4], %s124
      %s127 = sshll.u32 [#allocation7], 4
      %s128 = int_to_ptr.vmem [resolvable:$true] %s127
      %130 = dma.vmem_to_hbm [thread:$0]  %s128, 32, %s2, [#allocation4]
    $region25: #{tpu_custom_call.1} parent=1 // pred_fallthru
      _
    // Predicated region
    $region26: #{tpu_custom_call.1} parent=1 // pred_check
      _
    $region27: #{tpu_custom_call.1} parent=1 // pred_check_branch
      %132 = sbr.rel (0) target = $region29
    $region28: #{tpu_custom_call.1} parent=1 // pred_region
      %s134 = ssub.s32 32, 32
      %135 = vsyncadd [#allocation9], %s134
      %s137 = sshll.u32 [#allocation8], 4
      %s138 = int_to_ptr.vmem [resolvable:$true] %s137
      %140 = dma.vmem_to_hbm [thread:$0]  %s138, 32, %s3, [#allocation9]
    $region29: #{tpu_custom_call.1} parent=1 // pred_fallthru
      _
    // Predicated region
    $region30: #{tpu_custom_call.1} parent=1 // pred_check
      _
    $region31: #{tpu_custom_call.1} parent=1 // pred_check_branch
      %142 = sbr.rel (0) target = $region33
    $region32: #{tpu_custom_call.1} parent=1 // pred_region
      %s144 = ssub.s32 32, 32
      %145 = vsyncadd [#allocation9], %s144
      %s147 = sshll.u32 [#allocation10], 4
      %s148 = int_to_ptr.vmem [resolvable:$true] %s147
      %150 = dma.vmem_to_hbm [thread:$0]  %s148, 32, %s4, [#allocation9]
    $region33: #{tpu_custom_call.1} parent=1 // pred_fallthru
      _
    // Predicated region
    $region34: #{tpu_custom_call.1} parent=1 // pred_check
      _
    $region35: #{tpu_custom_call.1} parent=1 // pred_check_branch
      %152 = sbr.rel (0) target = $region37
    $region36: #{tpu_custom_call.1} parent=1 // pred_region
      %153 = dma.done [#allocation4], 32
    $region37: #{tpu_custom_call.1} parent=1 // pred_fallthru
      _
    // Predicated region
    $region38: #{tpu_custom_call.1} parent=1 // pred_check
      _
    $region39: #{tpu_custom_call.1} parent=1 // pred_check_branch
      %155 = sbr.rel (0) target = $region41
    $region40: #{tpu_custom_call.1} parent=1 // pred_region
      %156 = dma.done [#allocation9], 32
    $region41: #{tpu_custom_call.1} parent=1 // pred_fallthru
      _
    // Predicated region
    $region42: #{tpu_custom_call.1} parent=1 // pred_check
      _
    $region43: #{tpu_custom_call.1} parent=1 // pred_check_branch
      %158 = sbr.rel (0) target = $region45
    $region44: #{tpu_custom_call.1} parent=1 // pred_region
      %159 = dma.done [#allocation9], 32
    $region45: #{tpu_custom_call.1} parent=1 // pred_fallthru
      _
    %160 = vsyncpa [#allocation3], 1
    %161 = vsyncpa [#allocation6], 1
    %162 = vsyncpa [#allocation4], 1
    %163 = vsyncpa [#allocation9], 1

</llo_original>
